<compile_context>
chip_gen: v7x
topology: tpu7x:2x2x1
jax: 0.10.0
libtpu: 0.0.40
codegen_flags: <defaults>
</compile_context>

<pallas_src>
import functools

import jax
import jax.numpy as jnp
from jax.experimental import pallas as pl
from jax.experimental.pallas import tpu as pltpu

_SUBLANE_F32 = 8   # f32 sublane multiple; keep small-batch pad at 8 (NOT 16)
_TM_MAX = 256      # batch tile for large N (fills MXU rows on v6e/v7x)


def _ae_kernel(acts, x_ref, w_first_ref, w_small_ref, w_last_ref, b_ref, out_ref):
    """Fused encoder+decoder MLP forward for one batch tile.

    acts: static per-layer activation tags ("relu" | "none" | "sigmoid").
    """
    n_layers = len(acts)
    smax = w_small_ref.shape[-1]        # padded width of the small square layers
    out_w = w_last_ref.shape[-1]

    def _act(h, tag):
        if tag == "relu":
            return jnp.maximum(h, 0.0)
        if tag == "sigmoid":
            # sigmoid(x) == 0.5*tanh(x/2) + 0.5 : one EUP transcendental, no divide.
            return 0.5 * jnp.tanh(0.5 * h) + 0.5
        return h                        # "none" (encoder latent projection)

    def _bias(layer, width):
        # Static slice of the packed bias slab -> f32 [1, width].
        return b_ref[layer:layer + 1, :width]

    # ---- layer 0: big encoder weight (x already bf16 from the wrapper) ----------
    h = jnp.dot(x_ref[...], w_first_ref[...], preferred_element_type=jnp.float32)
    h = _act(h + _bias(0, smax), acts[0])

    # ---- middle layers: packed bf16 slab of zero-padded [smax, smax] tiles ------
    for li in range(1, n_layers - 1):
        w = w_small_ref[li - 1]                                  # bf16 [smax, smax]
        h = jnp.dot(h.astype(jnp.bfloat16), w, preferred_element_type=jnp.float32)
        h = _act(h + _bias(li, smax), acts[li])

    # ---- last layer: big decoder weight + sigmoid --------------------------------
    h = jnp.dot(h.astype(jnp.bfloat16), w_last_ref[...],
                preferred_element_type=jnp.float32)
    h = _act(h + _bias(n_layers - 1, out_w), acts[n_layers - 1])
    out_ref[...] = h.astype(out_ref.dtype)


def pack_params(params):
    """Pack per-layer (W [in,out], b [out]) into 4 DMA-friendly buffers.

    Returns (w_first bf16, w_small bf16 [n_mid, smax, smax], w_last bf16,
             b_slab f32 [n_layers, out_features]).  All padding is zeros, so the
    padded rows/columns contribute exactly 0 to every matmul.
    """
    n_layers = len(params)
    small_dims = []
    for i, (w, _) in enumerate(params):
        if i > 0:
            small_dims.append(w.shape[0])
        if i < n_layers - 1:
            small_dims.append(w.shape[1])
    smax = max(small_dims)

    def pad_to(a, shape):
        return jnp.pad(a, [(0, t - s) for s, t in zip(a.shape, shape)])

    w0, _ = params[0]
    w_first = pad_to(w0, (w0.shape[0], smax)).astype(jnp.bfloat16)

    w_small = jnp.stack(
        [pad_to(w, (smax, smax)) for (w, _) in params[1:-1]]).astype(jnp.bfloat16)

    wl, _ = params[-1]
    w_last = pad_to(wl, (smax, wl.shape[1])).astype(jnp.bfloat16)

    bias_w = max(max(w.shape[1] for (w, _) in params), smax)
    b_slab = jnp.concatenate(
        [pad_to(b.reshape(1, -1), (1, bias_w)) for (_, b) in params],
        axis=0).astype(jnp.float32)

    return w_first, w_small, w_last, b_slab


def ae_forward(x, packed, acts, img_shape, *, out_dtype=jnp.float32):
    """Fused AE forward.  Returns (x_recon [N,C,H,W], None)."""
    c, hgt, wid = img_shape
    in_features = c * hgt * wid
    n = x.shape[0]

    # bf16 input halves the x DMA; the kernel casts to bf16 before every dot anyway.
    x_flat = x.reshape(n, in_features).astype(jnp.bfloat16)

    # Batch tiling: tiny batches -> one step padded to the f32 sublane multiple (8);
    # large batches -> tm=256 tiles over a "parallel" grid axis (v7x: 2 TCs).
    if n > _TM_MAX:
        tm = _TM_MAX
    else:
        tm = max(_SUBLANE_F32, ((n + _SUBLANE_F32 - 1) // _SUBLANE_F32) * _SUBLANE_F32)
    n_pad = ((n + tm - 1) // tm) * tm
    if n_pad != n:
        x_flat = jnp.pad(x_flat, ((0, n_pad - n), (0, 0)))
    grid_m = n_pad // tm

    w_first, w_small, w_last, b_slab = packed
    out_features = w_last.shape[1]

    kernel = functools.partial(_ae_kernel, tuple(acts))

    out = pl.pallas_call(
        kernel,
        out_shape=jax.ShapeDtypeStruct((n_pad, out_features), out_dtype),
        grid_spec=pltpu.PrefetchScalarGridSpec(
            num_scalar_prefetch=0,
            grid=(grid_m,),
            in_specs=[
                pl.BlockSpec((tm, in_features), lambda i: (i, 0)),
                # Constant block indices -> weights/biases stay VMEM-resident
                # across grid steps (no re-DMA after the first iteration).
                pl.BlockSpec(w_first.shape, lambda i: (0, 0)),
                pl.BlockSpec(w_small.shape, lambda i: (0, 0, 0)),
                pl.BlockSpec(w_last.shape, lambda i: (0, 0)),
                pl.BlockSpec(b_slab.shape, lambda i: (0, 0)),
            ],
            out_specs=pl.BlockSpec((tm, out_features), lambda i: (i, 0)),
        ),
        compiler_params=pltpu.CompilerParams(
            dimension_semantics=("parallel",)),
    )(x_flat, w_first, w_small, w_last, b_slab)

    x_recon = out[:n].astype(jnp.float32).reshape(n, c, hgt, wid)
    return x_recon, None   # q_z is None in the non-variational path


def init_params(key, img_shape, hidden_dims, latent):
    """nn.Linear-style init U[-1/sqrt(fan_in), 1/sqrt(fan_in)]; W stored [in, out] f32."""
    c, h, w = img_shape
    in_features = c * h * w
    enc_dims = [in_features] + list(hidden_dims) + [latent]
    dec_dims = [latent] + list(hidden_dims) + [in_features]

    def make_layers(key, dims):
        layers = []
        for i in range(len(dims) - 1):
            fan_in, fan_out = dims[i], dims[i + 1]
            key, kw, kb = jax.random.split(key, 3)
            bound = 1.0 / (fan_in ** 0.5)
            w_ = jax.random.uniform(kw, (fan_in, fan_out), jnp.float32, -bound, bound)
            b_ = jax.random.uniform(kb, (fan_out,), jnp.float32, -bound, bound)
            layers.append((w_, b_))
        return key, layers

    key, enc = make_layers(key, enc_dims)
    key, dec = make_layers(key, dec_dims)
    params = enc + dec
    acts = (["relu"] * len(hidden_dims) + ["none"]        # encoder
            + ["relu"] * len(hidden_dims) + ["sigmoid"])  # decoder
    return params, acts


def reference_forward(x, params, acts, img_shape):
    """Pure-JAX reference with the same bf16-weight / f32-accumulate precision policy."""
    c, hgt, wid = img_shape
    n = x.shape[0]
    h = x.reshape(n, -1)
    for (w, b), act in zip(params, acts):
        h = jnp.dot(h.astype(jnp.bfloat16), w.astype(jnp.bfloat16),
                    preferred_element_type=jnp.float32) + b[None, :]
        if act == "relu":
            h = jnp.maximum(h, 0.0)
        elif act == "sigmoid":
            h = jax.nn.sigmoid(h)
    return h.reshape(n, c, hgt, wid)


if __name__ == "__main__":
    img_shape = (4, 16, 16)      # C, H, W -> in/out_features = 1024
    hidden_dims = (32, 32)
    latent = 8
    batch = 2

    key = jax.random.PRNGKey(0)
    key, kx = jax.random.split(key)
    x = jax.random.normal(kx, (batch,) + img_shape, dtype=jnp.float32)

    params, acts = init_params(key, img_shape, hidden_dims, latent)
    packed = pack_params(params)

    x_recon, q_z = ae_forward(x, packed, acts, img_shape)
    x_recon = jax.block_until_ready(x_recon)

    x_ref = reference_forward(x, params, acts, img_shape)
    assert x_recon.shape == (batch,) + img_shape
    assert q_z is None
    assert jnp.allclose(x_recon, x_ref, atol=2e-3, rtol=2e-3)

    print("KERNEL_OK")
</pallas_src>

<mosaic_0001>
module attributes {stable_mosaic.version = 11 : i64} {
  func.func @_ae_kernel(%arg0: i32, %arg1: memref<8x1024xbf16, #tpu.memory_space<vmem>>, %arg2: memref<1024x32xbf16, #tpu.memory_space<vmem>>, %arg3: memref<4x32x32xbf16, #tpu.memory_space<vmem>>, %arg4: memref<32x1024xbf16, #tpu.memory_space<vmem>>, %arg5: memref<6x1024xf32, #tpu.memory_space<vmem>>, %arg6: memref<8x1024xf32, #tpu.memory_space<vmem>>) attributes {dimension_semantics = [#tpu.dimension_semantics<parallel>], iteration_bounds = array<i64: 1>, scalar_prefetch = 0 : i64, scratch_operands = 0 : i64, tpu.core_type = #tpu.core_type<tc>, window_params = [{transform_indices = @transform_0, window_bounds = array<i64: 8, 1024>}, {pipeline_mode = #tpu.pipeline_mode<synchronous>, transform_indices = @transform_1, window_bounds = array<i64: 1024, 32>}, {pipeline_mode = #tpu.pipeline_mode<synchronous>, transform_indices = @transform_2, window_bounds = array<i64: 4, 32, 32>}, {pipeline_mode = #tpu.pipeline_mode<synchronous>, transform_indices = @transform_3, window_bounds = array<i64: 32, 1024>}, {pipeline_mode = #tpu.pipeline_mode<synchronous>, transform_indices = @transform_4, window_bounds = array<i64: 6, 1024>}, {transform_indices = @transform_5, window_bounds = array<i64: 8, 1024>}]} {
    %c0 = arith.constant 0 : index
    %c0_0 = arith.constant 0 : index
    %0 = vector.load %arg1[%c0, %c0_0] : memref<8x1024xbf16, #tpu.memory_space<vmem>>, vector<8x1024xbf16>
    %c0_1 = arith.constant 0 : index
    %c0_2 = arith.constant 0 : index
    %1 = vector.load %arg2[%c0_1, %c0_2] : memref<1024x32xbf16, #tpu.memory_space<vmem>>, vector<1024x32xbf16>
    %cst = arith.constant dense<0.000000e+00> : vector<8x32xf32>
    %2 = tpu.matmul %0, %1, %cst {dimension_numbers = #tpu.dot_dimension_numbers<[1], [0], [0], [1], [0, 0, 1, 1], [], []>} : vector<8x1024xbf16>, vector<1024x32xbf16>, vector<8x32xf32> -> vector<8x32xf32>
    %c0_3 = arith.constant 0 : index
    %c0_4 = arith.constant 0 : index
    %3 = vector.load %arg5[%c0_3, %c0_4] : memref<6x1024xf32, #tpu.memory_space<vmem>>, vector<1x32xf32>
    %4 = vector.broadcast %3 : vector<1x32xf32> to vector<8x32xf32>
    %5 = arith.addf %2, %4 : vector<8x32xf32>
    %cst_5 = arith.constant 0.000000e+00 : f32
    %6 = vector.broadcast %cst_5 : f32 to vector<8x32xf32>
    %7 = arith.maximumf %5, %6 : vector<8x32xf32>
    %c0_6 = arith.constant 0 : index
    %c0_7 = arith.constant 0 : index
    %c0_8 = arith.constant 0 : index
    %8 = vector.load %arg3[%c0_6, %c0_7, %c0_8] : memref<4x32x32xbf16, #tpu.memory_space<vmem>>, vector<1x32x32xbf16>
    %9 = vector.shape_cast %8 : vector<1x32x32xbf16> to vector<32x32xbf16>
    %10 = arith.truncf %7 : vector<8x32xf32> to vector<8x32xbf16>
    %cst_9 = arith.constant dense<0.000000e+00> : vector<8x32xf32>
    %11 = tpu.matmul %10, %9, %cst_9 {dimension_numbers = #tpu.dot_dimension_numbers<[1], [0], [0], [1], [0, 0, 1, 1], [], []>} : vector<8x32xbf16>, vector<32x32xbf16>, vector<8x32xf32> -> vector<8x32xf32>
    %c1 = arith.constant 1 : index
    %c0_10 = arith.constant 0 : index
    %12 = vector.load %arg5[%c1, %c0_10] : memref<6x1024xf32, #tpu.memory_space<vmem>>, vector<1x32xf32>
    %13 = vector.broadcast %12 : vector<1x32xf32> to vector<8x32xf32>
    %14 = arith.addf %11, %13 : vector<8x32xf32>
    %cst_11 = arith.constant 0.000000e+00 : f32
    %15 = vector.broadcast %cst_11 : f32 to vector<8x32xf32>
    %16 = arith.maximumf %14, %15 : vector<8x32xf32>
    %c1_12 = arith.constant 1 : index
    %c0_13 = arith.constant 0 : index
    %c0_14 = arith.constant 0 : index
    %17 = vector.load %arg3[%c1_12, %c0_13, %c0_14] : memref<4x32x32xbf16, #tpu.memory_space<vmem>>, vector<1x32x32xbf16>
    %18 = vector.shape_cast %17 : vector<1x32x32xbf16> to vector<32x32xbf16>
    %19 = arith.truncf %16 : vector<8x32xf32> to vector<8x32xbf16>
    %cst_15 = arith.constant dense<0.000000e+00> : vector<8x32xf32>
    %20 = tpu.matmul %19, %18, %cst_15 {dimension_numbers = #tpu.dot_dimension_numbers<[1], [0], [0], [1], [0, 0, 1, 1], [], []>} : vector<8x32xbf16>, vector<32x32xbf16>, vector<8x32xf32> -> vector<8x32xf32>
    %c2 = arith.constant 2 : index
    %c0_16 = arith.constant 0 : index
    %21 = vector.load %arg5[%c2, %c0_16] : memref<6x1024xf32, #tpu.memory_space<vmem>>, vector<1x32xf32>
    %22 = vector.broadcast %21 : vector<1x32xf32> to vector<8x32xf32>
    %23 = arith.addf %20, %22 : vector<8x32xf32>
    %c2_17 = arith.constant 2 : index
    %c0_18 = arith.constant 0 : index
    %c0_19 = arith.constant 0 : index
    %24 = vector.load %arg3[%c2_17, %c0_18, %c0_19] : memref<4x32x32xbf16, #tpu.memory_space<vmem>>, vector<1x32x32xbf16>
    %25 = vector.shape_cast %24 : vector<1x32x32xbf16> to vector<32x32xbf16>
    %26 = arith.truncf %23 : vector<8x32xf32> to vector<8x32xbf16>
    %cst_20 = arith.constant dense<0.000000e+00> : vector<8x32xf32>
    %27 = tpu.matmul %26, %25, %cst_20 {dimension_numbers = #tpu.dot_dimension_numbers<[1], [0], [0], [1], [0, 0, 1, 1], [], []>} : vector<8x32xbf16>, vector<32x32xbf16>, vector<8x32xf32> -> vector<8x32xf32>
    %c3 = arith.constant 3 : index
    %c0_21 = arith.constant 0 : index
    %28 = vector.load %arg5[%c3, %c0_21] : memref<6x1024xf32, #tpu.memory_space<vmem>>, vector<1x32xf32>
    %29 = vector.broadcast %28 : vector<1x32xf32> to vector<8x32xf32>
    %30 = arith.addf %27, %29 : vector<8x32xf32>
    %cst_22 = arith.constant 0.000000e+00 : f32
    %31 = vector.broadcast %cst_22 : f32 to vector<8x32xf32>
    %32 = arith.maximumf %30, %31 : vector<8x32xf32>
    %c3_23 = arith.constant 3 : index
    %c0_24 = arith.constant 0 : index
    %c0_25 = arith.constant 0 : index
    %33 = vector.load %arg3[%c3_23, %c0_24, %c0_25] : memref<4x32x32xbf16, #tpu.memory_space<vmem>>, vector<1x32x32xbf16>
    %34 = vector.shape_cast %33 : vector<1x32x32xbf16> to vector<32x32xbf16>
    %35 = arith.truncf %32 : vector<8x32xf32> to vector<8x32xbf16>
    %cst_26 = arith.constant dense<0.000000e+00> : vector<8x32xf32>
    %36 = tpu.matmul %35, %34, %cst_26 {dimension_numbers = #tpu.dot_dimension_numbers<[1], [0], [0], [1], [0, 0, 1, 1], [], []>} : vector<8x32xbf16>, vector<32x32xbf16>, vector<8x32xf32> -> vector<8x32xf32>
    %c4 = arith.constant 4 : index
    %c0_27 = arith.constant 0 : index
    %37 = vector.load %arg5[%c4, %c0_27] : memref<6x1024xf32, #tpu.memory_space<vmem>>, vector<1x32xf32>
    %38 = vector.broadcast %37 : vector<1x32xf32> to vector<8x32xf32>
    %39 = arith.addf %36, %38 : vector<8x32xf32>
    %cst_28 = arith.constant 0.000000e+00 : f32
    %40 = vector.broadcast %cst_28 : f32 to vector<8x32xf32>
    %41 = arith.maximumf %39, %40 : vector<8x32xf32>
    %42 = arith.truncf %41 : vector<8x32xf32> to vector<8x32xbf16>
    %c0_29 = arith.constant 0 : index
    %c0_30 = arith.constant 0 : index
    %43 = vector.load %arg4[%c0_29, %c0_30] : memref<32x1024xbf16, #tpu.memory_space<vmem>>, vector<32x1024xbf16>
    %cst_31 = arith.constant dense<0.000000e+00> : vector<8x1024xf32>
    %44 = tpu.matmul %42, %43, %cst_31 {dimension_numbers = #tpu.dot_dimension_numbers<[1], [0], [0], [1], [0, 0, 1, 1], [], []>} : vector<8x32xbf16>, vector<32x1024xbf16>, vector<8x1024xf32> -> vector<8x1024xf32>
    %c5 = arith.constant 5 : index
    %c0_32 = arith.constant 0 : index
    %45 = vector.load %arg5[%c5, %c0_32] : memref<6x1024xf32, #tpu.memory_space<vmem>>, vector<1x1024xf32>
    %46 = vector.broadcast %45 : vector<1x1024xf32> to vector<8x1024xf32>
    %47 = arith.addf %44, %46 : vector<8x1024xf32>
    %cst_33 = arith.constant 5.000000e-01 : f32
    %48 = vector.broadcast %cst_33 : f32 to vector<8x1024xf32>
    %49 = arith.mulf %48, %47 : vector<8x1024xf32>
    %50 = math.tanh %49 : vector<8x1024xf32>
    %cst_34 = arith.constant 5.000000e-01 : f32
    %51 = vector.broadcast %cst_34 : f32 to vector<8x1024xf32>
    %52 = arith.mulf %51, %50 : vector<8x1024xf32>
    %cst_35 = arith.constant 5.000000e-01 : f32
    %53 = vector.broadcast %cst_35 : f32 to vector<8x1024xf32>
    %54 = arith.addf %52, %53 : vector<8x1024xf32>
    %c0_36 = arith.constant 0 : index
    %c0_37 = arith.constant 0 : index
    %55 = vector.load %arg6[%c0_36, %c0_37] : memref<8x1024xf32, #tpu.memory_space<vmem>>, vector<8x1024xf32>
    tpu.vector_store %arg6[%c0_36, %c0_37], %54 {strides = array<i32>} : memref<8x1024xf32, #tpu.memory_space<vmem>>, vector<8x1024xf32>,
    return
  }
  func.func @transform_0(%arg0: i32) -> (i32, i32) {
    %c0_i32 = arith.constant 0 : i32
    %c0_i32_0 = arith.constant 0 : i32
    return %arg0, %c0_i32 : i32, i32
  }
  func.func @transform_1(%arg0: i32) -> (i32, i32) {
    %c0_i32 = arith.constant 0 : i32
    %c0_i32_0 = arith.constant 0 : i32
    %c0_i32_1 = arith.constant 0 : i32
    return %c0_i32, %c0_i32_0 : i32, i32
  }
  func.func @transform_2(%arg0: i32) -> (i32, i32, i32) {
    %c0_i32 = arith.constant 0 : i32
    %c0_i32_0 = arith.constant 0 : i32
    %c0_i32_1 = arith.constant 0 : i32
    %c0_i32_2 = arith.constant 0 : i32
    return %c0_i32, %c0_i32_0, %c0_i32_1 : i32, i32, i32
  }
  func.func @transform_3(%arg0: i32) -> (i32, i32) {
    %c0_i32 = arith.constant 0 : i32
    %c0_i32_0 = arith.constant 0 : i32
    %c0_i32_1 = arith.constant 0 : i32
    return %c0_i32, %c0_i32_0 : i32, i32
  }
  func.func @transform_4(%arg0: i32) -> (i32, i32) {
    %c0_i32 = arith.constant 0 : i32
    %c0_i32_0 = arith.constant 0 : i32
    %c0_i32_1 = arith.constant 0 : i32
    return %c0_i32, %c0_i32_0 : i32, i32
  }
  func.func @transform_5(%arg0: i32) -> (i32, i32) {
    %c0_i32 = arith.constant 0 : i32
    %c0_i32_0 = arith.constant 0 : i32
    return %arg0, %c0_i32 : i32, i32
  }
}

</mosaic_0001>

<llo_original>
// kernel: tpu_custom_call.1
$region0: #{tpu_custom_call.1}
  #allocation0 [shape = 'u32[]', space=smem, size = 0x4, offset = 0x4, fixed_abs, tag = 'smem constant byte address 0x4 - core index']
  #allocation1 [shape = 'u32[144,128]{1,0:T(1,128)}', space=vmem, size = 0x12000, scoped, tag = 'internal scratch']
  %s0 = inlined_call_operand.vmem [shape: bf16[8,1024], index: 0, kind: input, shape index: {}]
  %s1 = inlined_call_operand.vmem [shape: bf16[1024,32], index: 1, kind: input, shape index: {}]
  %s2 = inlined_call_operand.vmem [shape: bf16[4,32,32], index: 2, kind: input, shape index: {}]
  %s3 = inlined_call_operand.vmem [shape: bf16[32,1024], index: 3, kind: input, shape index: {}]
  %s4 = inlined_call_operand.vmem [shape: f32[6,1024], index: 4, kind: input, shape index: {}]
  %s5 = inlined_call_operand.hbm [shape: f32[8,1024], index: 5, kind: output, shape index: {}]
  %s6 = sld [smem:[#allocation0]]
  $region30: #{tpu_custom_call.1} parent=0
    _
  %s8 = ssub.s32 1, %s6
  %s9 = scalar_select 0, %s8, %s6
  $region1: #{tpu_custom_call.1} parent=0
    #allocation2 [shape = 'u8[32768]{0}', space=vmem, size = 0x8000, scoped, tag = 'output window, operand 0, single buffered']
    #allocation3 [shape = 's32[1]{0}', space=sflag, size = 0x4, scoped, tag = 'scoped memory for tpu_custom_call.1']
    %10 = vsyncpa [#allocation3], 0
    // Predicated region
    $region2: #{tpu_custom_call.1} parent=1 // pred_check
      _
    $region3: #{tpu_custom_call.1} parent=1 // pred_check_branch
      %12 = sbr.rel (0) target = $region5
    $region4: #{tpu_custom_call.1} parent=1 // pred_region
      _
    $region5: #{tpu_custom_call.1} parent=1 // pred_fallthru
      _
    // Predicated region
    $region6: #{tpu_custom_call.1} parent=1 // pred_check
      _
    $region7: #{tpu_custom_call.1} parent=1 // pred_check_branch
      %14 = sbr.rel (0) target = $region9
    $region8: #{tpu_custom_call.1} parent=1 // pred_region
      _
    $region9: #{tpu_custom_call.1} parent=1 // pred_fallthru
      _
    // Predicated region
    $region10: #{tpu_custom_call.1} parent=1 // pred_check
      _
    $region11: #{tpu_custom_call.1} parent=1 // pred_check_branch
      %16 = sbr.rel (0) target = $region13
    $region12: #{tpu_custom_call.1} parent=1 // pred_region
      _
    $region13: #{tpu_custom_call.1} parent=1 // pred_fallthru
      _
    // Predicated region
    $region14: #{tpu_custom_call.1} parent=1 // pred_check
      _
    $region15: #{tpu_custom_call.1} parent=1 // pred_check_branch
      %18 = sbr.rel (0) target = $region17
    $region16: #{tpu_custom_call.1} parent=1 // pred_region
      _
    $region17: #{tpu_custom_call.1} parent=1 // pred_fallthru
      _
    // Predicated region
    $region18: #{tpu_custom_call.1} parent=1 // pred_check
      _
    $region19: #{tpu_custom_call.1} parent=1 // pred_check_branch
      %20 = sbr.rel (0) target = $region21
    $region20: #{tpu_custom_call.1} parent=1 // pred_region
      _
    $region21: #{tpu_custom_call.1} parent=1 // pred_fallthru
      _
    %v22 = vld [vmem:[%s0] sm:$0xff]
    %v23 = vld [vmem:[%s0 + $0x8] sm:$0xff]
    %v24 = vld [vmem:[%s0 + $0x10] sm:$0xff]
    %v25 = vld [vmem:[%s0 + $0x18] sm:$0xff]
    %v26 = vld [vmem:[%s1] sm:$0xf]
    %v27 = vld [vmem:[%s1 + $0x4] sm:$0xf]
    %v28 = vld [vmem:[%s1 + $0x8] sm:$0xf]
    %v29 = vld [vmem:[%s1 + $0xc] sm:$0xf]
    %v30 = vld [vmem:[%s1 + $0x10] sm:$0xf]
    %v31 = vld [vmem:[%s1 + $0x14] sm:$0xf]
    %v32 = vld [vmem:[%s1 + $0x18] sm:$0xf]
    %v33 = vld [vmem:[%s1 + $0x1c] sm:$0xf]
    %v34 = vld [vmem:[%s1 + $0x20] sm:$0xf]
    %v35 = vld [vmem:[%s1 + $0x24] sm:$0xf]
    %v36 = vld [vmem:[%s1 + $0x28] sm:$0xf]
    %v37 = vld [vmem:[%s1 + $0x2c] sm:$0xf]
    %v38 = vld [vmem:[%s1 + $0x30] sm:$0xf]
    %v39 = vld [vmem:[%s1 + $0x34] sm:$0xf]
    %v40 = vld [vmem:[%s1 + $0x38] sm:$0xf]
    %v41 = vld [vmem:[%s1 + $0x3c] sm:$0xf]
    %v42 = vld [vmem:[%s1 + $0x40] sm:$0xf]
    %v43 = vld [vmem:[%s1 + $0x44] sm:$0xf]
    %v44 = vld [vmem:[%s1 + $0x48] sm:$0xf]
    %v45 = vld [vmem:[%s1 + $0x4c] sm:$0xf]
    %v46 = vld [vmem:[%s1 + $0x50] sm:$0xf]
    %v47 = vld [vmem:[%s1 + $0x54] sm:$0xf]
    %v48 = vld [vmem:[%s1 + $0x58] sm:$0xf]
    %v49 = vld [vmem:[%s1 + $0x5c] sm:$0xf]
    %v50 = vld [vmem:[%s1 + $0x60] sm:$0xf]
    %v51 = vld [vmem:[%s1 + $0x64] sm:$0xf]
    %v52 = vld [vmem:[%s1 + $0x68] sm:$0xf]
    %v53 = vld [vmem:[%s1 + $0x6c] sm:$0xf]
    %v54 = vld [vmem:[%s1 + $0x70] sm:$0xf]
    %v55 = vld [vmem:[%s1 + $0x74] sm:$0xf]
    %v56 = vld [vmem:[%s1 + $0x78] sm:$0xf]
    %v57 = vld [vmem:[%s1 + $0x7c] sm:$0xf]
    %v58 = vld [vmem:[%s1 + $0x80] sm:$0xf]
    %v59 = vld [vmem:[%s1 + $0x84] sm:$0xf]
    %v60 = vld [vmem:[%s1 + $0x88] sm:$0xf]
    %v61 = vld [vmem:[%s1 + $0x8c] sm:$0xf]
    %v62 = vld [vmem:[%s1 + $0x90] sm:$0xf]
    %v63 = vld [vmem:[%s1 + $0x94] sm:$0xf]
    %v64 = vld [vmem:[%s1 + $0x98] sm:$0xf]
    %v65 = vld [vmem:[%s1 + $0x9c] sm:$0xf]
    %v66 = vld [vmem:[%s1 + $0xa0] sm:$0xf]
    %v67 = vld [vmem:[%s1 + $0xa4] sm:$0xf]
    %v68 = vld [vmem:[%s1 + $0xa8] sm:$0xf]
    %v69 = vld [vmem:[%s1 + $0xac] sm:$0xf]
    %v70 = vld [vmem:[%s1 + $0xb0] sm:$0xf]
    %v71 = vld [vmem:[%s1 + $0xb4] sm:$0xf]
    %v72 = vld [vmem:[%s1 + $0xb8] sm:$0xf]
    %v73 = vld [vmem:[%s1 + $0xbc] sm:$0xf]
    %v74 = vld [vmem:[%s1 + $0xc0] sm:$0xf]
    %v75 = vld [vmem:[%s1 + $0xc4] sm:$0xf]
    %v76 = vld [vmem:[%s1 + $0xc8] sm:$0xf]
    %v77 = vld [vmem:[%s1 + $0xcc] sm:$0xf]
    %v78 = vld [vmem:[%s1 + $0xd0] sm:$0xf]
    %v79 = vld [vmem:[%s1 + $0xd4] sm:$0xf]
    %v80 = vld [vmem:[%s1 + $0xd8] sm:$0xf]
    %v81 = vld [vmem:[%s1 + $0xdc] sm:$0xf]
    %v82 = vld [vmem:[%s1 + $0xe0] sm:$0xf]
    %v83 = vld [vmem:[%s1 + $0xe4] sm:$0xf]
    %v84 = vld [vmem:[%s1 + $0xe8] sm:$0xf]
    %v85 = vld [vmem:[%s1 + $0xec] sm:$0xf]
    %v86 = vld [vmem:[%s1 + $0xf0] sm:$0xf]
    %v87 = vld [vmem:[%s1 + $0xf4] sm:$0xf]
    %v88 = vld [vmem:[%s1 + $0xf8] sm:$0xf]
    %v89 = vld [vmem:[%s1 + $0xfc] sm:$0xf]
    %v90 = vld [vmem:[%s1 + $0x100] sm:$0xf]
    %v91 = vld [vmem:[%s1 + $0x104] sm:$0xf]
    %v92 = vld [vmem:[%s1 + $0x108] sm:$0xf]
    %v93 = vld [vmem:[%s1 + $0x10c] sm:$0xf]
    %v94 = vld [vmem:[%s1 + $0x110] sm:$0xf]
    %v95 = vld [vmem:[%s1 + $0x114] sm:$0xf]
    %v96 = vld [vmem:[%s1 + $0x118] sm:$0xf]
    %v97 = vld [vmem:[%s1 + $0x11c] sm:$0xf]
    %v98 = vld [vmem:[%s1 + $0x120] sm:$0xf]
    %v99 = vld [vmem:[%s1 + $0x124] sm:$0xf]
    %v100 = vld [vmem:[%s1 + $0x128] sm:$0xf]
    %v101 = vld [vmem:[%s1 + $0x12c] sm:$0xf]
    %v102 = vld [vmem:[%s1 + $0x130] sm:$0xf]
    %v103 = vld [vmem:[%s1 + $0x134] sm:$0xf]
    %v104 = vld [vmem:[%s1 + $0x138] sm:$0xf]
    %v105 = vld [vmem:[%s1 + $0x13c] sm:$0xf]
    %v106 = vld [vmem:[%s1 + $0x140] sm:$0xf]
    %v107 = vld [vmem:[%s1 + $0x144] sm:$0xf]
    %v108 = vld [vmem:[%s1 + $0x148] sm:$0xf]
    %v109 = vld [vmem:[%s1 + $0x14c] sm:$0xf]
    %v110 = vld [vmem:[%s1 + $0x150] sm:$0xf]
    %v111 = vld [vmem:[%s1 + $0x154] sm:$0xf]
    %v112 = vld [vmem:[%s1 + $0x158] sm:$0xf]
    %v113 = vld [vmem:[%s1 + $0x15c] sm:$0xf]
    %v114 = vld [vmem:[%s1 + $0x160] sm:$0xf]
    %v115 = vld [vmem:[%s1 + $0x164] sm:$0xf]
    %v116 = vld [vmem:[%s1 + $0x168] sm:$0xf]
    %v117 = vld [vmem:[%s1 + $0x16c] sm:$0xf]
    %v118 = vld [vmem:[%s1 + $0x170] sm:$0xf]
    %v119 = vld [vmem:[%s1 + $0x174] sm:$0xf]
    %v120 = vld [vmem:[%s1 + $0x178] sm:$0xf]
    %v121 = vld [vmem:[%s1 + $0x17c] sm:$0xf]
    %v122 = vld [vmem:[%s1 + $0x180] sm:$0xf]
    %v123 = vld [vmem:[%s1 + $0x184] sm:$0xf]
    %v124 = vld [vmem:[%s1 + $0x188] sm:$0xf]
    %v125 = vld [vmem:[%s1 + $0x18c] sm:$0xf]
    %v126 = vld [vmem:[%s1 + $0x190] sm:$0xf]
    %v127 = vld [vmem:[%s1 + $0x194] sm:$0xf]
    %v128 = vld [vmem:[%s1 + $0x198] sm:$0xf]
    %v129 = vld [vmem:[%s1 + $0x19c] sm:$0xf]
    %v130 = vld [vmem:[%s1 + $0x1a0] sm:$0xf]
    %v131 = vld [vmem:[%s1 + $0x1a4] sm:$0xf]
    %v132 = vld [vmem:[%s1 + $0x1a8] sm:$0xf]
    %v133 = vld [vmem:[%s1 + $0x1ac] sm:$0xf]
    %v134 = vld [vmem:[%s1 + $0x1b0] sm:$0xf]
    %v135 = vld [vmem:[%s1 + $0x1b4] sm:$0xf]
    %v136 = vld [vmem:[%s1 + $0x1b8] sm:$0xf]
    %v137 = vld [vmem:[%s1 + $0x1bc] sm:$0xf]
    %v138 = vld [vmem:[%s1 + $0x1c0] sm:$0xf]
    %v139 = vld [vmem:[%s1 + $0x1c4] sm:$0xf]
    %v140 = vld [vmem:[%s1 + $0x1c8] sm:$0xf]
    %v141 = vld [vmem:[%s1 + $0x1cc] sm:$0xf]
    %v142 = vld [vmem:[%s1 + $0x1d0] sm:$0xf]
    %v143 = vld [vmem:[%s1 + $0x1d4] sm:$0xf]
    %v144 = vld [vmem:[%s1 + $0x1d8] sm:$0xf]
    %v145 = vld [vmem:[%s1 + $0x1dc] sm:$0xf]
    %v146 = vld [vmem:[%s1 + $0x1e0] sm:$0xf]
    %v147 = vld [vmem:[%s1 + $0x1e4] sm:$0xf]
    %v148 = vld [vmem:[%s1 + $0x1e8] sm:$0xf]
    %v149 = vld [vmem:[%s1 + $0x1ec] sm:$0xf]
    %v150 = vld [vmem:[%s1 + $0x1f0] sm:$0xf]
    %v151 = vld [vmem:[%s1 + $0x1f4] sm:$0xf]
    %v152 = vld [vmem:[%s1 + $0x1f8] sm:$0xf]
    %v153 = vld [vmem:[%s1 + $0x1fc] sm:$0xf]
    %v154 = vld [vmem:[%s4] ss:$0 sm:$0xff]
    %v159 = vunpack.c.l.b16 %v22
    %v160 = vunpack.c.h.b16 %v22
    %v161 = vunpack.c.l.b16 %v23
    %v162 = vunpack.c.h.b16 %v23
    %v163 = vunpack.c.l.b16 %v24
    %v164 = vunpack.c.h.b16 %v24
    %v165 = vunpack.c.l.b16 %v25
    %v166 = vunpack.c.h.b16 %v25
    %v167 = vpack.c.b16 %v159, %v159
    %v168 = vpack.c.b16 %v160, %v160
    %v169 = vpack.c.b16 %v161, %v161
    %v170 = vpack.c.b16 %v162, %v162
    %v171 = vpack.c.b16 %v163, %v163
    %v172 = vpack.c.b16 %v164, %v164
    %v173 = vpack.c.b16 %v165, %v165
    %v174 = vpack.c.b16 %v166, %v166
    %v311 = vunpack.c.l.b16 %v26
    %v312 = vunpack.c.l.b16 %v27
    %v313 = vunpack.c.l.b16 %v28
    %v314 = vunpack.c.l.b16 %v29
    %v315 = vunpack.c.l.b16 %v30
    %v316 = vunpack.c.l.b16 %v31
    %v317 = vunpack.c.l.b16 %v32
    %v318 = vunpack.c.l.b16 %v33
    %v319 = vunpack.c.l.b16 %v34
    %v320 = vunpack.c.l.b16 %v35
    %v321 = vunpack.c.l.b16 %v36
    %v322 = vunpack.c.l.b16 %v37
    %v323 = vunpack.c.l.b16 %v38
    %v324 = vunpack.c.l.b16 %v39
    %v325 = vunpack.c.l.b16 %v40
    %v326 = vunpack.c.l.b16 %v41
    %v327 = vunpack.c.l.b16 %v42
    %v328 = vunpack.c.l.b16 %v43
    %v329 = vunpack.c.l.b16 %v44
    %v330 = vunpack.c.l.b16 %v45
    %v331 = vunpack.c.l.b16 %v46
    %v332 = vunpack.c.l.b16 %v47
    %v333 = vunpack.c.l.b16 %v48
    %v334 = vunpack.c.l.b16 %v49
    %v335 = vunpack.c.l.b16 %v50
    %v336 = vunpack.c.l.b16 %v51
    %v337 = vunpack.c.l.b16 %v52
    %v338 = vunpack.c.l.b16 %v53
    %v339 = vunpack.c.l.b16 %v54
    %v340 = vunpack.c.l.b16 %v55
    %v341 = vunpack.c.l.b16 %v56
    %v342 = vunpack.c.l.b16 %v57
    %v343 = vunpack.c.l.b16 %v58
    %v344 = vunpack.c.l.b16 %v59
    %v345 = vunpack.c.l.b16 %v60
    %v346 = vunpack.c.l.b16 %v61
    %v347 = vunpack.c.l.b16 %v62
    %v348 = vunpack.c.l.b16 %v63
    %v349 = vunpack.c.l.b16 %v64
    %v350 = vunpack.c.l.b16 %v65
    %v351 = vunpack.c.l.b16 %v66
    %v352 = vunpack.c.l.b16 %v67
    %v353 = vunpack.c.l.b16 %v68
    %v354 = vunpack.c.l.b16 %v69
    %v355 = vunpack.c.l.b16 %v70
    %v356 = vunpack.c.l.b16 %v71
    %v357 = vunpack.c.l.b16 %v72
    %v358 = vunpack.c.l.b16 %v73
    %v359 = vunpack.c.l.b16 %v74
    %v360 = vunpack.c.l.b16 %v75
    %v361 = vunpack.c.l.b16 %v76
    %v362 = vunpack.c.l.b16 %v77
    %v363 = vunpack.c.l.b16 %v78
    %v364 = vunpack.c.l.b16 %v79
    %v365 = vunpack.c.l.b16 %v80
    %v366 = vunpack.c.l.b16 %v81
    %v367 = vunpack.c.l.b16 %v82
    %v368 = vunpack.c.l.b16 %v83
    %v369 = vunpack.c.l.b16 %v84
    %v370 = vunpack.c.l.b16 %v85
    %v371 = vunpack.c.l.b16 %v86
    %v372 = vunpack.c.l.b16 %v87
    %v373 = vunpack.c.l.b16 %v88
    %v374 = vunpack.c.l.b16 %v89
    %v375 = vunpack.c.l.b16 %v90
    %v376 = vunpack.c.l.b16 %v91
    %v377 = vunpack.c.l.b16 %v92
    %v378 = vunpack.c.l.b16 %v93
    %v379 = vunpack.c.l.b16 %v94
    %v380 = vunpack.c.l.b16 %v95
    %v381 = vunpack.c.l.b16 %v96
    %v382 = vunpack.c.l.b16 %v97
    %v383 = vunpack.c.l.b16 %v98
    %v384 = vunpack.c.l.b16 %v99
    %v385 = vunpack.c.l.b16 %v100
    %v386 = vunpack.c.l.b16 %v101
    %v387 = vunpack.c.l.b16 %v102
    %v388 = vunpack.c.l.b16 %v103
    %v389 = vunpack.c.l.b16 %v104
    %v390 = vunpack.c.l.b16 %v105
    %v391 = vunpack.c.l.b16 %v106
    %v392 = vunpack.c.l.b16 %v107
    %v393 = vunpack.c.l.b16 %v108
    %v394 = vunpack.c.l.b16 %v109
    %v395 = vunpack.c.l.b16 %v110
    %v396 = vunpack.c.l.b16 %v111
    %v397 = vunpack.c.l.b16 %v112
    %v398 = vunpack.c.l.b16 %v113
    %v399 = vunpack.c.l.b16 %v114
    %v400 = vunpack.c.l.b16 %v115
    %v401 = vunpack.c.l.b16 %v116
    %v402 = vunpack.c.l.b16 %v117
    %v403 = vunpack.c.l.b16 %v118
    %v404 = vunpack.c.l.b16 %v119
    %v405 = vunpack.c.l.b16 %v120
    %v406 = vunpack.c.l.b16 %v121
    %v407 = vunpack.c.l.b16 %v122
    %v408 = vunpack.c.l.b16 %v123
    %v409 = vunpack.c.l.b16 %v124
    %v410 = vunpack.c.l.b16 %v125
    %v411 = vunpack.c.l.b16 %v126
    %v412 = vunpack.c.l.b16 %v127
    %v413 = vunpack.c.l.b16 %v128
    %v414 = vunpack.c.l.b16 %v129
    %v415 = vunpack.c.l.b16 %v130
    %v416 = vunpack.c.l.b16 %v131
    %v417 = vunpack.c.l.b16 %v132
    %v418 = vunpack.c.l.b16 %v133
    %v419 = vunpack.c.l.b16 %v134
    %v420 = vunpack.c.l.b16 %v135
    %v421 = vunpack.c.l.b16 %v136
    %v422 = vunpack.c.l.b16 %v137
    %v423 = vunpack.c.l.b16 %v138
    %v424 = vunpack.c.l.b16 %v139
    %v425 = vunpack.c.l.b16 %v140
    %v426 = vunpack.c.l.b16 %v141
    %v427 = vunpack.c.l.b16 %v142
    %v428 = vunpack.c.l.b16 %v143
    %v429 = vunpack.c.l.b16 %v144
    %v430 = vunpack.c.l.b16 %v145
    %v431 = vunpack.c.l.b16 %v146
    %v432 = vunpack.c.l.b16 %v147
    %v433 = vunpack.c.l.b16 %v148
    %v434 = vunpack.c.l.b16 %v149
    %v435 = vunpack.c.l.b16 %v150
    %v436 = vunpack.c.l.b16 %v151
    %v437 = vunpack.c.l.b16 %v152
    %v438 = vunpack.c.l.b16 %v153
    %v439 = vpack.c.b16 %v312, %v311
    %v440 = vpack.c.b16 %v314, %v313
    %v441 = vpack.c.b16 %v316, %v315
    %v442 = vpack.c.b16 %v318, %v317
    %v443 = vpack.c.b16 %v320, %v319
    %v444 = vpack.c.b16 %v322, %v321
    %v445 = vpack.c.b16 %v324, %v323
    %v446 = vpack.c.b16 %v326, %v325
    %v447 = vpack.c.b16 %v328, %v327
    %v448 = vpack.c.b16 %v330, %v329
    %v449 = vpack.c.b16 %v332, %v331
    %v450 = vpack.c.b16 %v334, %v333
    %v451 = vpack.c.b16 %v336, %v335
    %v452 = vpack.c.b16 %v338, %v337
    %v453 = vpack.c.b16 %v340, %v339
    %v454 = vpack.c.b16 %v342, %v341
    %v455 = vpack.c.b16 %v344, %v343
    %v456 = vpack.c.b16 %v346, %v345
    %v457 = vpack.c.b16 %v348, %v347
    %v458 = vpack.c.b16 %v350, %v349
    %v459 = vpack.c.b16 %v352, %v351
    %v460 = vpack.c.b16 %v354, %v353
    %v461 = vpack.c.b16 %v356, %v355
    %v462 = vpack.c.b16 %v358, %v357
    %v463 = vpack.c.b16 %v360, %v359
    %v464 = vpack.c.b16 %v362, %v361
    %v465 = vpack.c.b16 %v364, %v363
    %v466 = vpack.c.b16 %v366, %v365
    %v467 = vpack.c.b16 %v368, %v367
    %v468 = vpack.c.b16 %v370, %v369
    %v469 = vpack.c.b16 %v372, %v371
    %v470 = vpack.c.b16 %v374, %v373
    %v471 = vpack.c.b16 %v376, %v375
    %v472 = vpack.c.b16 %v378, %v377
    %v473 = vpack.c.b16 %v380, %v379
    %v474 = vpack.c.b16 %v382, %v381
    %v475 = vpack.c.b16 %v384, %v383
    %v476 = vpack.c.b16 %v386, %v385
    %v477 = vpack.c.b16 %v388, %v387
    %v478 = vpack.c.b16 %v390, %v389
    %v479 = vpack.c.b16 %v392, %v391
    %v480 = vpack.c.b16 %v394, %v393
    %v481 = vpack.c.b16 %v396, %v395
    %v482 = vpack.c.b16 %v398, %v397
    %v483 = vpack.c.b16 %v400, %v399
    %v484 = vpack.c.b16 %v402, %v401
    %v485 = vpack.c.b16 %v404, %v403
    %v486 = vpack.c.b16 %v406, %v405
    %v487 = vpack.c.b16 %v408, %v407
    %v488 = vpack.c.b16 %v410, %v409
    %v489 = vpack.c.b16 %v412, %v411
    %v490 = vpack.c.b16 %v414, %v413
    %v491 = vpack.c.b16 %v416, %v415
    %v492 = vpack.c.b16 %v418, %v417
    %v493 = vpack.c.b16 %v420, %v419
    %v494 = vpack.c.b16 %v422, %v421
    %v495 = vpack.c.b16 %v424, %v423
    %v496 = vpack.c.b16 %v426, %v425
    %v497 = vpack.c.b16 %v428, %v427
    %v498 = vpack.c.b16 %v430, %v429
    %v499 = vpack.c.b16 %v432, %v431
    %v500 = vpack.c.b16 %v434, %v433
    %v501 = vpack.c.b16 %v436, %v435
    %v502 = vpack.c.b16 %v438, %v437
    %567 = vmatprep.subr.bf16.mxu0 0
    %568 = vmatpush1.bf16.msra.mxu0 %v439
    %569 = vmatprep.subr.bf16.mxu0 0
    %570 = vmatpush1.bf16.msra.mxu0 %v440
    %571 = vmatprep.subr.bf16.mxu0 0
    %572 = vmatpush1.bf16.msra.mxu0 %v441
    %573 = vmatprep.subr.bf16.mxu0 0
    %574 = vmatpush1.bf16.msra.mxu0 %v442
    %575 = vmatprep.subr.bf16.mxu0 0
    %576 = vmatpush1.bf16.msra.mxu0 %v443
    %577 = vmatprep.subr.bf16.mxu0 0
    %578 = vmatpush1.bf16.msra.mxu0 %v444
    %579 = vmatprep.subr.bf16.mxu0 0
    %580 = vmatpush1.bf16.msra.mxu0 %v445
    %581 = vmatprep.subr.bf16.mxu0 0
    %582 = vmatpush1.bf16.msra.mxu0 %v446
    %583 = vmatprep.subr.bf16.mxu0 0
    %584 = vmatpush1.bf16.msra.mxu0 %v447
    %585 = vmatprep.subr.bf16.mxu0 0
    %586 = vmatpush1.bf16.msra.mxu0 %v448
    %587 = vmatprep.subr.bf16.mxu0 0
    %588 = vmatpush1.bf16.msra.mxu0 %v449
    %589 = vmatprep.subr.bf16.mxu0 0
    %590 = vmatpush1.bf16.msra.mxu0 %v450
    %591 = vmatprep.subr.bf16.mxu0 0
    %592 = vmatpush1.bf16.msra.mxu0 %v451
    %593 = vmatprep.subr.bf16.mxu0 0
    %594 = vmatpush1.bf16.msra.mxu0 %v452
    %595 = vmatprep.subr.bf16.mxu0 0
    %596 = vmatpush1.bf16.msra.mxu0 %v453
    %597 = vmatprep.subr.bf16.mxu0 0
    %598 = vmatpush1.bf16.msra.mxu0 %v454
    %599 = vmatprep.mubr.bf16.mxu0 %v168
    %600 = vmatmul.mubr.bf16.gmra.mrb[0].mxu0 %v167
    %v601 = vpop.f32.mrb[0].mxu0
    %v602 = vadd.f32 %v154, %v601
    %v603 = vpop.f32.mrb[0].mxu0
    %v604 = vpop.f32.mrb[0].mxu0
    %v605 = vpop.f32.mrb[0].mxu0
    %606 = vdwg.mxu0
    %607 = vmatprep.subr.bf16.mxu0 0
    %608 = vmatpush1.bf16.msra.mxu0 %v455
    %609 = vmatprep.subr.bf16.mxu0 0
    %610 = vmatpush1.bf16.msra.mxu0 %v456
    %611 = vmatprep.subr.bf16.mxu0 0
    %612 = vmatpush1.bf16.msra.mxu0 %v457
    %613 = vmatprep.subr.bf16.mxu0 0
    %614 = vmatpush1.bf16.msra.mxu0 %v458
    %615 = vmatprep.subr.bf16.mxu0 0
    %616 = vmatpush1.bf16.msra.mxu0 %v459
    %617 = vmatprep.subr.bf16.mxu0 0
    %618 = vmatpush1.bf16.msra.mxu0 %v460
    %619 = vmatprep.subr.bf16.mxu0 0
    %620 = vmatpush1.bf16.msra.mxu0 %v461
    %621 = vmatprep.subr.bf16.mxu0 0
    %622 = vmatpush1.bf16.msra.mxu0 %v462
    %623 = vmatprep.subr.bf16.mxu0 0
    %624 = vmatpush1.bf16.msra.mxu0 %v463
    %625 = vmatprep.subr.bf16.mxu0 0
    %626 = vmatpush1.bf16.msra.mxu0 %v464
    %627 = vmatprep.subr.bf16.mxu0 0
    %628 = vmatpush1.bf16.msra.mxu0 %v465
    %629 = vmatprep.subr.bf16.mxu0 0
    %630 = vmatpush1.bf16.msra.mxu0 %v466
    %631 = vmatprep.subr.bf16.mxu0 0
    %632 = vmatpush1.bf16.msra.mxu0 %v467
    %633 = vmatprep.subr.bf16.mxu0 0
    %634 = vmatpush1.bf16.msra.mxu0 %v468
    %635 = vmatprep.subr.bf16.mxu0 0
    %636 = vmatpush1.bf16.msra.mxu0 %v469
    %637 = vmatprep.subr.bf16.mxu0 0
    %638 = vmatpush1.bf16.msra.mxu0 %v470
    %639 = vmatprep.mubr.bf16.mxu0 %v170
    %640 = vmatmul.mubr.bf16.gmra.mrb[0].mxu0 %v169
    %v641 = vpop.f32.mrb[0].mxu0
    %v642 = vadd.f32 %v602, %v641
    %v643 = vpop.f32.mrb[0].mxu0
    %v644 = vpop.f32.mrb[0].mxu0
    %v645 = vpop.f32.mrb[0].mxu0
    %646 = vdwg.mxu0
    %647 = vmatprep.subr.bf16.mxu0 0
    %648 = vmatpush1.bf16.msra.mxu0 %v471
    %649 = vmatprep.subr.bf16.mxu0 0
    %650 = vmatpush1.bf16.msra.mxu0 %v472
    %651 = vmatprep.subr.bf16.mxu0 0
    %652 = vmatpush1.bf16.msra.mxu0 %v473
    %653 = vmatprep.subr.bf16.mxu0 0
    %654 = vmatpush1.bf16.msra.mxu0 %v474
    %655 = vmatprep.subr.bf16.mxu0 0
    %656 = vmatpush1.bf16.msra.mxu0 %v475
    %657 = vmatprep.subr.bf16.mxu0 0
    %658 = vmatpush1.bf16.msra.mxu0 %v476
    %659 = vmatprep.subr.bf16.mxu0 0
    %660 = vmatpush1.bf16.msra.mxu0 %v477
    %661 = vmatprep.subr.bf16.mxu0 0
    %662 = vmatpush1.bf16.msra.mxu0 %v478
    %663 = vmatprep.subr.bf16.mxu0 0
    %664 = vmatpush1.bf16.msra.mxu0 %v479
    %665 = vmatprep.subr.bf16.mxu0 0
    %666 = vmatpush1.bf16.msra.mxu0 %v480
    %667 = vmatprep.subr.bf16.mxu0 0
    %668 = vmatpush1.bf16.msra.mxu0 %v481
    %669 = vmatprep.subr.bf16.mxu0 0
    %670 = vmatpush1.bf16.msra.mxu0 %v482
    %671 = vmatprep.subr.bf16.mxu0 0
    %672 = vmatpush1.bf16.msra.mxu0 %v483
    %673 = vmatprep.subr.bf16.mxu0 0
    %674 = vmatpush1.bf16.msra.mxu0 %v484
    %675 = vmatprep.subr.bf16.mxu0 0
    %676 = vmatpush1.bf16.msra.mxu0 %v485
    %677 = vmatprep.subr.bf16.mxu0 0
    %678 = vmatpush1.bf16.msra.mxu0 %v486
    %679 = vmatprep.mubr.bf16.mxu0 %v172
    %680 = vmatmul.mubr.bf16.gmra.mrb[0].mxu0 %v171
    %v681 = vpop.f32.mrb[0].mxu0
    %v682 = vadd.f32 %v642, %v681
    %v683 = vpop.f32.mrb[0].mxu0
    %v684 = vpop.f32.mrb[0].mxu0
    %v685 = vpop.f32.mrb[0].mxu0
    %686 = vdwg.mxu0
    %687 = vmatprep.subr.bf16.mxu0 0
    %688 = vmatpush1.bf16.msra.mxu0 %v487
    %689 = vmatprep.subr.bf16.mxu0 0
    %690 = vmatpush1.bf16.msra.mxu0 %v488
    %691 = vmatprep.subr.bf16.mxu0 0
    %692 = vmatpush1.bf16.msra.mxu0 %v489
    %693 = vmatprep.subr.bf16.mxu0 0
    %694 = vmatpush1.bf16.msra.mxu0 %v490
    %695 = vmatprep.subr.bf16.mxu0 0
    %696 = vmatpush1.bf16.msra.mxu0 %v491
    %697 = vmatprep.subr.bf16.mxu0 0
    %698 = vmatpush1.bf16.msra.mxu0 %v492
    %699 = vmatprep.subr.bf16.mxu0 0
    %700 = vmatpush1.bf16.msra.mxu0 %v493
    %701 = vmatprep.subr.bf16.mxu0 0
    %702 = vmatpush1.bf16.msra.mxu0 %v494
    %703 = vmatprep.subr.bf16.mxu0 0
    %704 = vmatpush1.bf16.msra.mxu0 %v495
    %705 = vmatprep.subr.bf16.mxu0 0
    %706 = vmatpush1.bf16.msra.mxu0 %v496
    %707 = vmatprep.subr.bf16.mxu0 0
    %708 = vmatpush1.bf16.msra.mxu0 %v497
    %709 = vmatprep.subr.bf16.mxu0 0
    %710 = vmatpush1.bf16.msra.mxu0 %v498
    %711 = vmatprep.subr.bf16.mxu0 0
    %712 = vmatpush1.bf16.msra.mxu0 %v499
    %713 = vmatprep.subr.bf16.mxu0 0
    %714 = vmatpush1.bf16.msra.mxu0 %v500
    %715 = vmatprep.subr.bf16.mxu0 0
    %716 = vmatpush1.bf16.msra.mxu0 %v501
    %717 = vmatprep.subr.bf16.mxu0 0
    %718 = vmatpush1.bf16.msra.mxu0 %v502
    %719 = vmatprep.mubr.bf16.mxu0 %v174
    %720 = vmatmul.mubr.bf16.gmra.mrb[0].mxu0 %v173
    %v721 = vpop.f32.mrb[0].mxu0
    %v722 = vadd.f32 %v682, %v721
    %v723 = vpop.f32.mrb[0].mxu0
    %v724 = vpop.f32.mrb[0].mxu0
    %v725 = vpop.f32.mrb[0].mxu0
    %726 = vdwg.mxu0
    %v727 = vmax.f32 %v722, 0.0
    %v728 = vld [vmem:[%s2] sm:$0xf]
    %v729 = vld [vmem:[%s2 + $0x4] sm:$0xf]
    %v730 = vld [vmem:[%s2 + $0x8] sm:$0xf]
    %v731 = vld [vmem:[%s2 + $0xc] sm:$0xf]
    %v732 = vpack.c.bf16 %v727, %v727
    %v733 = vld [vmem:[%s4 + $0x1] ss:$0 sm:$0xff]
    %v738 = vunpack.c.l.b16 %v728
    %v739 = vunpack.c.l.b16 %v729
    %v740 = vunpack.c.l.b16 %v730
    %v741 = vunpack.c.l.b16 %v731
    %v742 = vpack.c.b16 %v739, %v738
    %v743 = vpack.c.b16 %v741, %v740
    %vm746 = vcmask 261120
    %v748 = vsel %vm746, %v732, 0
    %750 = vmatprep.subr.bf16.mxu0 0
    %751 = vmatpush1.bf16.msra.mxu0 %v742
    %752 = vmatprep.subr.bf16.mxu0 0
    %753 = vmatpush1.bf16.msra.mxu0 %v743
    %754 = vmatprep.subr.bf16.mxu0 0
    %755 = vmatpush1.bf16.msra.mxu0 0
    %756 = vmatprep.subr.bf16.mxu0 0
    %757 = vmatpush1.bf16.msra.mxu0 0
    %758 = vmatprep.subr.bf16.mxu0 0
    %759 = vmatpush1.bf16.msra.mxu0 0
    %760 = vmatprep.subr.bf16.mxu0 0
    %761 = vmatpush1.bf16.msra.mxu0 0
    %762 = vmatprep.subr.bf16.mxu0 0
    %763 = vmatpush1.bf16.msra.mxu0 0
    %764 = vmatprep.subr.bf16.mxu0 0
    %765 = vmatpush1.bf16.msra.mxu0 0
    %766 = vmatprep.subr.bf16.mxu0 0
    %767 = vmatpush1.bf16.msra.mxu0 0
    %768 = vmatprep.subr.bf16.mxu0 0
    %769 = vmatpush1.bf16.msra.mxu0 0
    %770 = vmatprep.subr.bf16.mxu0 0
    %771 = vmatpush1.bf16.msra.mxu0 0
    %772 = vmatprep.subr.bf16.mxu0 0
    %773 = vmatpush1.bf16.msra.mxu0 0
    %774 = vmatprep.subr.bf16.mxu0 0
    %775 = vmatpush1.bf16.msra.mxu0 0
    %776 = vmatprep.subr.bf16.mxu0 0
    %777 = vmatpush1.bf16.msra.mxu0 0
    %778 = vmatprep.subr.bf16.mxu0 0
    %779 = vmatpush1.bf16.msra.mxu0 0
    %780 = vmatprep.subr.bf16.mxu0 0
    %781 = vmatpush1.bf16.msra.mxu0 0
    %782 = vmatprep.mubr.bf16.mxu0 0
    %783 = vmatmul.mubr.bf16.gmra.mrb[0].mxu0 %v748
    %v784 = vpop.f32.mrb[0].mxu0
    %v785 = vadd.f32 %v733, %v784
    %v786 = vpop.f32.mrb[0].mxu0
    %v787 = vpop.f32.mrb[0].mxu0
    %v788 = vpop.f32.mrb[0].mxu0
    %789 = vdwg.mxu0
    %v790 = vmax.f32 %v785, 0.0
    %s791 = scalar_lea.vmem %s2, 16
    %v792 = vld [vmem:[%s791] sm:$0xf]
    %v793 = vld [vmem:[%s791 + $0x4] sm:$0xf]
    %v794 = vld [vmem:[%s791 + $0x8] sm:$0xf]
    %v795 = vld [vmem:[%s791 + $0xc] sm:$0xf]
    %v796 = vpack.c.bf16 %v790, %v790
    %v797 = vld [vmem:[%s4 + $0x2] ss:$0 sm:$0xff]
    %v802 = vunpack.c.l.b16 %v792
    %v803 = vunpack.c.l.b16 %v793
    %v804 = vunpack.c.l.b16 %v794
    %v805 = vunpack.c.l.b16 %v795
    %v806 = vpack.c.b16 %v803, %v802
    %v807 = vpack.c.b16 %v805, %v804
    %v811 = vsel %vm746, %v796, 0
    %813 = vmatprep.subr.bf16.mxu0 0
    %814 = vmatpush1.bf16.msra.mxu0 %v806
    %815 = vmatprep.subr.bf16.mxu0 0
    %816 = vmatpush1.bf16.msra.mxu0 %v807
    %817 = vmatprep.subr.bf16.mxu0 0
    %818 = vmatpush1.bf16.msra.mxu0 0
    %819 = vmatprep.subr.bf16.mxu0 0
    %820 = vmatpush1.bf16.msra.mxu0 0
    %821 = vmatprep.subr.bf16.mxu0 0
    %822 = vmatpush1.bf16.msra.mxu0 0
    %823 = vmatprep.subr.bf16.mxu0 0
    %824 = vmatpush1.bf16.msra.mxu0 0
    %825 = vmatprep.subr.bf16.mxu0 0
    %826 = vmatpush1.bf16.msra.mxu0 0
    %827 = vmatprep.subr.bf16.mxu0 0
    %828 = vmatpush1.bf16.msra.mxu0 0
    %829 = vmatprep.subr.bf16.mxu0 0
    %830 = vmatpush1.bf16.msra.mxu0 0
    %831 = vmatprep.subr.bf16.mxu0 0
    %832 = vmatpush1.bf16.msra.mxu0 0
    %833 = vmatprep.subr.bf16.mxu0 0
    %834 = vmatpush1.bf16.msra.mxu0 0
    %835 = vmatprep.subr.bf16.mxu0 0
    %836 = vmatpush1.bf16.msra.mxu0 0
    %837 = vmatprep.subr.bf16.mxu0 0
    %838 = vmatpush1.bf16.msra.mxu0 0
    %839 = vmatprep.subr.bf16.mxu0 0
    %840 = vmatpush1.bf16.msra.mxu0 0
    %841 = vmatprep.subr.bf16.mxu0 0
    %842 = vmatpush1.bf16.msra.mxu0 0
    %843 = vmatprep.subr.bf16.mxu0 0
    %844 = vmatpush1.bf16.msra.mxu0 0
    %845 = vmatprep.mubr.bf16.mxu0 0
    %846 = vmatmul.mubr.bf16.gmra.mrb[0].mxu0 %v811
    %v847 = vpop.f32.mrb[0].mxu0
    %v848 = vadd.f32 %v797, %v847
    %v849 = vpop.f32.mrb[0].mxu0
    %v850 = vpop.f32.mrb[0].mxu0
    %v851 = vpop.f32.mrb[0].mxu0
    %852 = vdwg.mxu0
    %s853 = scalar_lea.vmem %s2, 32
    %v854 = vld [vmem:[%s853] sm:$0xf]
    %v855 = vld [vmem:[%s853 + $0x4] sm:$0xf]
    %v856 = vld [vmem:[%s853 + $0x8] sm:$0xf]
    %v857 = vld [vmem:[%s853 + $0xc] sm:$0xf]
    %v858 = vpack.c.bf16 %v848, %v848
    %v859 = vld [vmem:[%s4 + $0x3] ss:$0 sm:$0xff]
    %v864 = vunpack.c.l.b16 %v854
    %v865 = vunpack.c.l.b16 %v855
    %v866 = vunpack.c.l.b16 %v856
    %v867 = vunpack.c.l.b16 %v857
    %v868 = vpack.c.b16 %v865, %v864
    %v869 = vpack.c.b16 %v867, %v866
    %v873 = vsel %vm746, %v858, 0
    %875 = vmatprep.subr.bf16.mxu0 0
    %876 = vmatpush1.bf16.msra.mxu0 %v868
    %877 = vmatprep.subr.bf16.mxu0 0
    %878 = vmatpush1.bf16.msra.mxu0 %v869
    %879 = vmatprep.subr.bf16.mxu0 0
    %880 = vmatpush1.bf16.msra.mxu0 0
    %881 = vmatprep.subr.bf16.mxu0 0
    %882 = vmatpush1.bf16.msra.mxu0 0
    %883 = vmatprep.subr.bf16.mxu0 0
    %884 = vmatpush1.bf16.msra.mxu0 0
    %885 = vmatprep.subr.bf16.mxu0 0
    %886 = vmatpush1.bf16.msra.mxu0 0
    %887 = vmatprep.subr.bf16.mxu0 0
    %888 = vmatpush1.bf16.msra.mxu0 0
    %889 = vmatprep.subr.bf16.mxu0 0
    %890 = vmatpush1.bf16.msra.mxu0 0
    %891 = vmatprep.subr.bf16.mxu0 0
    %892 = vmatpush1.bf16.msra.mxu0 0
    %893 = vmatprep.subr.bf16.mxu0 0
    %894 = vmatpush1.bf16.msra.mxu0 0
    %895 = vmatprep.subr.bf16.mxu0 0
    %896 = vmatpush1.bf16.msra.mxu0 0
    %897 = vmatprep.subr.bf16.mxu0 0
    %898 = vmatpush1.bf16.msra.mxu0 0
    %899 = vmatprep.subr.bf16.mxu0 0
    %900 = vmatpush1.bf16.msra.mxu0 0
    %901 = vmatprep.subr.bf16.mxu0 0
    %902 = vmatpush1.bf16.msra.mxu0 0
    %903 = vmatprep.subr.bf16.mxu0 0
    %904 = vmatpush1.bf16.msra.mxu0 0
    %905 = vmatprep.subr.bf16.mxu0 0
    %906 = vmatpush1.bf16.msra.mxu0 0
    %907 = vmatprep.mubr.bf16.mxu0 0
    %908 = vmatmul.mubr.bf16.gmra.mrb[0].mxu0 %v873
    %v909 = vpop.f32.mrb[0].mxu0
    %v910 = vadd.f32 %v859, %v909
    %v911 = vpop.f32.mrb[0].mxu0
    %v912 = vpop.f32.mrb[0].mxu0
    %v913 = vpop.f32.mrb[0].mxu0
    %914 = vdwg.mxu0
    %v915 = vmax.f32 %v910, 0.0
    %s916 = scalar_lea.vmem %s2, 48
    %v917 = vld [vmem:[%s916] sm:$0xf]
    %v918 = vld [vmem:[%s916 + $0x4] sm:$0xf]
    %v919 = vld [vmem:[%s916 + $0x8] sm:$0xf]
    %v920 = vld [vmem:[%s916 + $0xc] sm:$0xf]
    %v921 = vpack.c.bf16 %v915, %v915
    %v922 = vld [vmem:[%s4 + $0x4] ss:$0 sm:$0xff]
    %v927 = vunpack.c.l.b16 %v917
    %v928 = vunpack.c.l.b16 %v918
    %v929 = vunpack.c.l.b16 %v919
    %v930 = vunpack.c.l.b16 %v920
    %v931 = vpack.c.b16 %v928, %v927
    %v932 = vpack.c.b16 %v930, %v929
    %v936 = vsel %vm746, %v921, 0
    %938 = vmatprep.subr.bf16.mxu0 0
    %939 = vmatpush1.bf16.msra.mxu0 %v931
    %940 = vmatprep.subr.bf16.mxu0 0
    %941 = vmatpush1.bf16.msra.mxu0 %v932
    %942 = vmatprep.subr.bf16.mxu0 0
    %943 = vmatpush1.bf16.msra.mxu0 0
    %944 = vmatprep.subr.bf16.mxu0 0
    %945 = vmatpush1.bf16.msra.mxu0 0
    %946 = vmatprep.subr.bf16.mxu0 0
    %947 = vmatpush1.bf16.msra.mxu0 0
    %948 = vmatprep.subr.bf16.mxu0 0
    %949 = vmatpush1.bf16.msra.mxu0 0
    %950 = vmatprep.subr.bf16.mxu0 0
    %951 = vmatpush1.bf16.msra.mxu0 0
    %952 = vmatprep.subr.bf16.mxu0 0
    %953 = vmatpush1.bf16.msra.mxu0 0
    %954 = vmatprep.subr.bf16.mxu0 0
    %955 = vmatpush1.bf16.msra.mxu0 0
    %956 = vmatprep.subr.bf16.mxu0 0
    %957 = vmatpush1.bf16.msra.mxu0 0
    %958 = vmatprep.subr.bf16.mxu0 0
    %959 = vmatpush1.bf16.msra.mxu0 0
    %960 = vmatprep.subr.bf16.mxu0 0
    %961 = vmatpush1.bf16.msra.mxu0 0
    %962 = vmatprep.subr.bf16.mxu0 0
    %963 = vmatpush1.bf16.msra.mxu0 0
    %964 = vmatprep.subr.bf16.mxu0 0
    %965 = vmatpush1.bf16.msra.mxu0 0
    %966 = vmatprep.subr.bf16.mxu0 0
    %967 = vmatpush1.bf16.msra.mxu0 0
    %968 = vmatprep.subr.bf16.mxu0 0
    %969 = vmatpush1.bf16.msra.mxu0 0
    %970 = vmatprep.mubr.bf16.mxu0 0
    %971 = vmatmul.mubr.bf16.gmra.mrb[0].mxu0 %v936
    %v972 = vpop.f32.mrb[0].mxu0
    %v973 = vadd.f32 %v922, %v972
    %v974 = vpop.f32.mrb[0].mxu0
    %v975 = vpop.f32.mrb[0].mxu0
    %v976 = vpop.f32.mrb[0].mxu0
    %977 = vdwg.mxu0
    %v978 = vmax.f32 %v973, 0.0
    %v979 = vpack.c.bf16 %v978, %v978
    %v980 = vld [vmem:[%s3] sm:$0xff]
    %v981 = vld [vmem:[%s3 + $0x8] sm:$0xff]
    %v982 = vld [vmem:[%s3 + $0x10] sm:$0xff]
    %v983 = vld [vmem:[%s3 + $0x18] sm:$0xff]
    %v984 = vld [vmem:[%s3 + $0x20] sm:$0xff]
    %v985 = vld [vmem:[%s3 + $0x28] sm:$0xff]
    %v986 = vld [vmem:[%s3 + $0x30] sm:$0xff]
    %v987 = vld [vmem:[%s3 + $0x38] sm:$0xff]
    %v988 = vld [vmem:[%s3 + $0x40] sm:$0xff]
    %v989 = vld [vmem:[%s3 + $0x48] sm:$0xff]
    %v990 = vld [vmem:[%s3 + $0x50] sm:$0xff]
    %v991 = vld [vmem:[%s3 + $0x58] sm:$0xff]
    %v992 = vld [vmem:[%s3 + $0x60] sm:$0xff]
    %v993 = vld [vmem:[%s3 + $0x68] sm:$0xff]
    %v994 = vld [vmem:[%s3 + $0x70] sm:$0xff]
    %v995 = vld [vmem:[%s3 + $0x78] sm:$0xff]
    %s996 = scalar_lea.vmem %s4, 5
    %v997 = vld [vmem:[%s996] ss:$8 sm:$0xf]
    %v998 = vld [vmem:[%s996] ss:$8 sm:$0xf0]
    %v999 = vor.u32 %v997, %v998
    %v1001 = vlaneseq
    %v1002 = vshrl.u32 %v1001, 7
    %v1003 = vsub.s32 0, %v1002
    %v1004 = vrot.slane %v999, %v1003
    %v1005 = vlaneseq
    %v1006 = vshrl.u32 %v1005, 7
    %v1007 = vsub.s32 1, %v1006
    %v1008 = vrot.slane %v999, %v1007
    %v1009 = vlaneseq
    %v1010 = vshrl.u32 %v1009, 7
    %v1011 = vsub.s32 2, %v1010
    %v1012 = vrot.slane %v999, %v1011
    %v1013 = vlaneseq
    %v1014 = vshrl.u32 %v1013, 7
    %v1015 = vsub.s32 3, %v1014
    %v1016 = vrot.slane %v999, %v1015
    %v1017 = vlaneseq
    %v1018 = vshrl.u32 %v1017, 7
    %v1019 = vsub.s32 4, %v1018
    %v1020 = vrot.slane %v999, %v1019
    %v1021 = vlaneseq
    %v1022 = vshrl.u32 %v1021, 7
    %v1023 = vsub.s32 5, %v1022
    %v1024 = vrot.slane %v999, %v1023
    %v1025 = vlaneseq
    %v1026 = vshrl.u32 %v1025, 7
    %v1027 = vsub.s32 6, %v1026
    %v1028 = vrot.slane %v999, %v1027
    %v1029 = vlaneseq
    %v1030 = vshrl.u32 %v1029, 7
    %v1031 = vsub.s32 7, %v1030
    %v1032 = vrot.slane %v999, %v1031
    %v1057 = vunpack.c.l.b16 %v980
    %v1058 = vunpack.c.h.b16 %v980
    %v1059 = vunpack.c.l.b16 %v981
    %v1060 = vunpack.c.h.b16 %v981
    %v1061 = vunpack.c.l.b16 %v982
    %v1062 = vunpack.c.h.b16 %v982
    %v1063 = vunpack.c.l.b16 %v983
    %v1064 = vunpack.c.h.b16 %v983
    %v1065 = vunpack.c.l.b16 %v984
    %v1066 = vunpack.c.h.b16 %v984
    %v1067 = vunpack.c.l.b16 %v985
    %v1068 = vunpack.c.h.b16 %v985
    %v1069 = vunpack.c.l.b16 %v986
    %v1070 = vunpack.c.h.b16 %v986
    %v1071 = vunpack.c.l.b16 %v987
    %v1072 = vunpack.c.h.b16 %v987
    %v1073 = vunpack.c.l.b16 %v988
    %v1074 = vunpack.c.h.b16 %v988
    %v1075 = vunpack.c.l.b16 %v989
    %v1076 = vunpack.c.h.b16 %v989
    %v1077 = vunpack.c.l.b16 %v990
    %v1078 = vunpack.c.h.b16 %v990
    %v1079 = vunpack.c.l.b16 %v991
    %v1080 = vunpack.c.h.b16 %v991
    %v1081 = vunpack.c.l.b16 %v992
    %v1082 = vunpack.c.h.b16 %v992
    %v1083 = vunpack.c.l.b16 %v993
    %v1084 = vunpack.c.h.b16 %v993
    %v1085 = vunpack.c.l.b16 %v994
    %v1086 = vunpack.c.h.b16 %v994
    %v1087 = vunpack.c.l.b16 %v995
    %v1088 = vunpack.c.h.b16 %v995
    %v1089 = vpack.c.b16 %v1065, %v1057
    %v1090 = vpack.c.b16 %v1066, %v1058
    %v1091 = vpack.c.b16 %v1067, %v1059
    %v1092 = vpack.c.b16 %v1068, %v1060
    %v1093 = vpack.c.b16 %v1069, %v1061
    %v1094 = vpack.c.b16 %v1070, %v1062
    %v1095 = vpack.c.b16 %v1071, %v1063
    %v1096 = vpack.c.b16 %v1072, %v1064
    %v1097 = vpack.c.b16 %v1081, %v1073
    %v1098 = vpack.c.b16 %v1082, %v1074
    %v1099 = vpack.c.b16 %v1083, %v1075
    %v1100 = vpack.c.b16 %v1084, %v1076
    %v1101 = vpack.c.b16 %v1085, %v1077
    %v1102 = vpack.c.b16 %v1086, %v1078
    %v1103 = vpack.c.b16 %v1087, %v1079
    %v1104 = vpack.c.b16 %v1088, %v1080
    %v1122 = vsel %vm746, %v979, 0
    %1124 = vmatprep.subr.bf16.mxu0 %v1090
    %1125 = vmatpush1.bf16.msra.mxu0 %v1089
    %1126 = vmatprep.subr.bf16.mxu0 %v1098
    %1127 = vmatpush1.bf16.msra.mxu0 %v1097
    %1128 = vmatprep.subr.bf16.mxu0 0
    %1129 = vmatpush1.bf16.msra.mxu0 0
    %1130 = vmatprep.subr.bf16.mxu0 0
    %1131 = vmatpush1.bf16.msra.mxu0 0
    %1132 = vmatprep.subr.bf16.mxu0 0
    %1133 = vmatpush1.bf16.msra.mxu0 0
    %1134 = vmatprep.subr.bf16.mxu0 0
    %1135 = vmatpush1.bf16.msra.mxu0 0
    %1136 = vmatprep.subr.bf16.mxu0 0
    %1137 = vmatpush1.bf16.msra.mxu0 0
    %1138 = vmatprep.subr.bf16.mxu0 0
    %1139 = vmatpush1.bf16.msra.mxu0 0
    %1140 = vmatprep.subr.bf16.mxu0 0
    %1141 = vmatpush1.bf16.msra.mxu0 0
    %1142 = vmatprep.subr.bf16.mxu0 0
    %1143 = vmatpush1.bf16.msra.mxu0 0
    %1144 = vmatprep.subr.bf16.mxu0 0
    %1145 = vmatpush1.bf16.msra.mxu0 0
    %1146 = vmatprep.subr.bf16.mxu0 0
    %1147 = vmatpush1.bf16.msra.mxu0 0
    %1148 = vmatprep.subr.bf16.mxu0 0
    %1149 = vmatpush1.bf16.msra.mxu0 0
    %1150 = vmatprep.subr.bf16.mxu0 0
    %1151 = vmatpush1.bf16.msra.mxu0 0
    %1152 = vmatprep.subr.bf16.mxu0 0
    %1153 = vmatpush1.bf16.msra.mxu0 0
    %1154 = vmatprep.subr.bf16.mxu0 0
    %1155 = vmatpush1.bf16.msra.mxu0 0
    %1156 = vmatprep.mubr.bf16.mxu0 0
    %1157 = vmatmul.mubr.bf16.gmra.mrb[0].mxu0 %v1122
    %v1158 = vpop.f32.mrb[0].mxu0
    %v1159 = vadd.f32 %v1004, %v1158
    %v1160 = vpop.f32.mrb[0].mxu0
    %v1161 = vadd.f32 %v1008, %v1160
    %v1162 = vpop.f32.mrb[0].mxu0
    %v1163 = vpop.f32.mrb[0].mxu0
    %1164 = vdwg.mxu0
    %1165 = vmatprep.subr.bf16.mxu0 %v1092
    %1166 = vmatpush1.bf16.msra.mxu0 %v1091
    %1167 = vmatprep.subr.bf16.mxu0 %v1100
    %1168 = vmatpush1.bf16.msra.mxu0 %v1099
    %1169 = vmatprep.subr.bf16.mxu0 0
    %1170 = vmatpush1.bf16.msra.mxu0 0
    %1171 = vmatprep.subr.bf16.mxu0 0
    %1172 = vmatpush1.bf16.msra.mxu0 0
    %1173 = vmatprep.subr.bf16.mxu0 0
    %1174 = vmatpush1.bf16.msra.mxu0 0
    %1175 = vmatprep.subr.bf16.mxu0 0
    %1176 = vmatpush1.bf16.msra.mxu0 0
    %1177 = vmatprep.subr.bf16.mxu0 0
    %1178 = vmatpush1.bf16.msra.mxu0 0
    %1179 = vmatprep.subr.bf16.mxu0 0
    %1180 = vmatpush1.bf16.msra.mxu0 0
    %1181 = vmatprep.subr.bf16.mxu0 0
    %1182 = vmatpush1.bf16.msra.mxu0 0
    %1183 = vmatprep.subr.bf16.mxu0 0
    %1184 = vmatpush1.bf16.msra.mxu0 0
    %1185 = vmatprep.subr.bf16.mxu0 0
    %1186 = vmatpush1.bf16.msra.mxu0 0
    %1187 = vmatprep.subr.bf16.mxu0 0
    %1188 = vmatpush1.bf16.msra.mxu0 0
    %1189 = vmatprep.subr.bf16.mxu0 0
    %1190 = vmatpush1.bf16.msra.mxu0 0
    %1191 = vmatprep.subr.bf16.mxu0 0
    %1192 = vmatpush1.bf16.msra.mxu0 0
    %1193 = vmatprep.subr.bf16.mxu0 0
    %1194 = vmatpush1.bf16.msra.mxu0 0
    %1195 = vmatprep.subr.bf16.mxu0 0
    %1196 = vmatpush1.bf16.msra.mxu0 0
    %1197 = vmatprep.mubr.bf16.mxu0 0
    %1198 = vmatmul.mubr.bf16.gmra.mrb[0].mxu0 %v1122
    %v1199 = vpop.f32.mrb[0].mxu0
    %v1200 = vadd.f32 %v1012, %v1199
    %v1201 = vpop.f32.mrb[0].mxu0
    %v1202 = vadd.f32 %v1016, %v1201
    %v1203 = vpop.f32.mrb[0].mxu0
    %v1204 = vpop.f32.mrb[0].mxu0
    %1205 = vdwg.mxu0
    %1206 = vmatprep.subr.bf16.mxu0 %v1094
    %1207 = vmatpush1.bf16.msra.mxu0 %v1093
    %1208 = vmatprep.subr.bf16.mxu0 %v1102
    %1209 = vmatpush1.bf16.msra.mxu0 %v1101
    %1210 = vmatprep.subr.bf16.mxu0 0
    %1211 = vmatpush1.bf16.msra.mxu0 0
    %1212 = vmatprep.subr.bf16.mxu0 0
    %1213 = vmatpush1.bf16.msra.mxu0 0
    %1214 = vmatprep.subr.bf16.mxu0 0
    %1215 = vmatpush1.bf16.msra.mxu0 0
    %1216 = vmatprep.subr.bf16.mxu0 0
    %1217 = vmatpush1.bf16.msra.mxu0 0
    %1218 = vmatprep.subr.bf16.mxu0 0
    %1219 = vmatpush1.bf16.msra.mxu0 0
    %1220 = vmatprep.subr.bf16.mxu0 0
    %1221 = vmatpush1.bf16.msra.mxu0 0
    %1222 = vmatprep.subr.bf16.mxu0 0
    %1223 = vmatpush1.bf16.msra.mxu0 0
    %1224 = vmatprep.subr.bf16.mxu0 0
    %1225 = vmatpush1.bf16.msra.mxu0 0
    %1226 = vmatprep.subr.bf16.mxu0 0
    %1227 = vmatpush1.bf16.msra.mxu0 0
    %1228 = vmatprep.subr.bf16.mxu0 0
    %1229 = vmatpush1.bf16.msra.mxu0 0
    %1230 = vmatprep.subr.bf16.mxu0 0
    %1231 = vmatpush1.bf16.msra.mxu0 0
    %1232 = vmatprep.subr.bf16.mxu0 0
    %1233 = vmatpush1.bf16.msra.mxu0 0
    %1234 = vmatprep.subr.bf16.mxu0 0
    %1235 = vmatpush1.bf16.msra.mxu0 0
    %1236 = vmatprep.subr.bf16.mxu0 0
    %1237 = vmatpush1.bf16.msra.mxu0 0
    %1238 = vmatprep.mubr.bf16.mxu0 0
    %1239 = vmatmul.mubr.bf16.gmra.mrb[0].mxu0 %v1122
    %v1240 = vpop.f32.mrb[0].mxu0
    %v1241 = vadd.f32 %v1020, %v1240
    %v1242 = vpop.f32.mrb[0].mxu0
    %v1243 = vadd.f32 %v1024, %v1242
    %v1244 = vpop.f32.mrb[0].mxu0
    %v1245 = vpop.f32.mrb[0].mxu0
    %1246 = vdwg.mxu0
    %1247 = vmatprep.subr.bf16.mxu0 %v1096
    %1248 = vmatpush1.bf16.msra.mxu0 %v1095
    %1249 = vmatprep.subr.bf16.mxu0 %v1104
    %1250 = vmatpush1.bf16.msra.mxu0 %v1103
    %1251 = vmatprep.subr.bf16.mxu0 0
    %1252 = vmatpush1.bf16.msra.mxu0 0
    %1253 = vmatprep.subr.bf16.mxu0 0
    %1254 = vmatpush1.bf16.msra.mxu0 0
    %1255 = vmatprep.subr.bf16.mxu0 0
    %1256 = vmatpush1.bf16.msra.mxu0 0
    %1257 = vmatprep.subr.bf16.mxu0 0
    %1258 = vmatpush1.bf16.msra.mxu0 0
    %1259 = vmatprep.subr.bf16.mxu0 0
    %1260 = vmatpush1.bf16.msra.mxu0 0
    %1261 = vmatprep.subr.bf16.mxu0 0
    %1262 = vmatpush1.bf16.msra.mxu0 0
    %1263 = vmatprep.subr.bf16.mxu0 0
    %1264 = vmatpush1.bf16.msra.mxu0 0
    %1265 = vmatprep.subr.bf16.mxu0 0
    %1266 = vmatpush1.bf16.msra.mxu0 0
    %1267 = vmatprep.subr.bf16.mxu0 0
    %1268 = vmatpush1.bf16.msra.mxu0 0
    %1269 = vmatprep.subr.bf16.mxu0 0
    %1270 = vmatpush1.bf16.msra.mxu0 0
    %1271 = vmatprep.subr.bf16.mxu0 0
    %1272 = vmatpush1.bf16.msra.mxu0 0
    %1273 = vmatprep.subr.bf16.mxu0 0
    %1274 = vmatpush1.bf16.msra.mxu0 0
    %1275 = vmatprep.subr.bf16.mxu0 0
    %1276 = vmatpush1.bf16.msra.mxu0 0
    %1277 = vmatprep.subr.bf16.mxu0 0
    %1278 = vmatpush1.bf16.msra.mxu0 0
    %1279 = vmatprep.mubr.bf16.mxu0 0
    %1280 = vmatmul.mubr.bf16.gmra.mrb[0].mxu0 %v1122
    %v1281 = vpop.f32.mrb[0].mxu0
    %v1282 = vadd.f32 %v1028, %v1281
    %v1283 = vpop.f32.mrb[0].mxu0
    %v1284 = vadd.f32 %v1032, %v1283
    %v1285 = vpop.f32.mrb[0].mxu0
    %v1286 = vpop.f32.mrb[0].mxu0
    %1287 = vdwg.mxu0
    %v1288 = vmul.f32 %v1159, 0.5
    %v1289 = vmul.f32 %v1161, 0.5
    %v1290 = vmul.f32 %v1200, 0.5
    %v1291 = vmul.f32 %v1202, 0.5
    %v1292 = vmul.f32 %v1241, 0.5
    %v1293 = vmul.f32 %v1243, 0.5
    %v1294 = vmul.f32 %v1282, 0.5
    %v1295 = vmul.f32 %v1284, 0.5
    %v1296 = vtanh.pop %v1288
    %v1297 = vtanh.pop %v1289
    %v1298 = vtanh.pop %v1290
    %v1299 = vtanh.pop %v1291
    %v1300 = vtanh.pop %v1292
    %v1301 = vtanh.pop %v1293
    %v1302 = vtanh.pop %v1294
    %v1303 = vtanh.pop %v1295
    %v1304 = vmul.f32 %v1296, 0.5
    %v1305 = vmul.f32 %v1297, 0.5
    %v1306 = vmul.f32 %v1298, 0.5
    %v1307 = vmul.f32 %v1299, 0.5
    %v1308 = vmul.f32 %v1300, 0.5
    %v1309 = vmul.f32 %v1301, 0.5
    %v1310 = vmul.f32 %v1302, 0.5
    %v1311 = vmul.f32 %v1303, 0.5
    %v1312 = vadd.f32 %v1304, 0.5
    %v1313 = vadd.f32 %v1305, 0.5
    %v1314 = vadd.f32 %v1306, 0.5
    %v1315 = vadd.f32 %v1307, 0.5
    %v1316 = vadd.f32 %v1308, 0.5
    %v1317 = vadd.f32 %v1309, 0.5
    %v1318 = vadd.f32 %v1310, 0.5
    %v1319 = vadd.f32 %v1311, 0.5
    %1320 = vst [vmem:[#allocation2] sm:$0xff] %v1312
    %1321 = vst [vmem:[#allocation2 + $0x8] sm:$0xff] %v1313
    %1322 = vst [vmem:[#allocation2 + $0x10] sm:$0xff] %v1314
    %1323 = vst [vmem:[#allocation2 + $0x18] sm:$0xff] %v1315
    %1324 = vst [vmem:[#allocation2 + $0x20] sm:$0xff] %v1316
    %1325 = vst [vmem:[#allocation2 + $0x28] sm:$0xff] %v1317
    %1326 = vst [vmem:[#allocation2 + $0x30] sm:$0xff] %v1318
    %1327 = vst [vmem:[#allocation2 + $0x38] sm:$0xff] %v1319
    // Predicated region
    $region22: #{tpu_custom_call.1} parent=1 // pred_check
      _
    $region23: #{tpu_custom_call.1} parent=1 // pred_check_branch
      %1329 = sbr.rel (0) target = $region25
    $region24: #{tpu_custom_call.1} parent=1 // pred_region
      %s1331 = ssub.s32 1024, 1024
      %1332 = vsyncadd [#allocation3], %s1331
      %s1334 = sshll.u32 [#allocation2], 4
      %s1335 = int_to_ptr.vmem [resolvable:$true] %s1334
      %1337 = dma.vmem_to_hbm [thread:$0]  %s1335, 1024, %s5, [#allocation3]
    $region25: #{tpu_custom_call.1} parent=1 // pred_fallthru
      _
    // Predicated region
    $region26: #{tpu_custom_call.1} parent=1 // pred_check
      _
    $region27: #{tpu_custom_call.1} parent=1 // pred_check_branch
      %1339 = sbr.rel (0) target = $region29
    $region28: #{tpu_custom_call.1} parent=1 // pred_region
      %1340 = dma.done [#allocation3], 1024
    $region29: #{tpu_custom_call.1} parent=1 // pred_fallthru
      _
    %1341 = vsyncpa [#allocation3], 1

</llo_original>
